<compile_context>
chip_gen: v7x
topology: tpu7x:2x2x1
jax: 0.10.0
libtpu: 0.0.40
codegen_flags: <defaults>
</compile_context>

<pallas_src>
import jax
import jax.numpy as jnp
from jax.experimental import pallas as pl
from jax.experimental.pallas import tpu as pltpu

LANES = 128


def outconv_kernel(x_ref, w_ref, b_ref, o_ref):
    # x_ref: (nb, Cin, tr, 128) VMEM   w_ref: (Cout, Cin) SMEM   b_ref: (Cout,) SMEM
    # o_ref: (nb, Cout, tr, 128) VMEM
    cin = x_ref.shape[1]
    cout = o_ref.shape[1]

    # Load each input channel slab once: dense (nb, tr, 128) tiles.
    xs = [x_ref[:, ci, :, :].astype(jnp.float32) for ci in range(cin)]

    # Fully unrolled VPU broadcast-FMA over the tiny channel dims.
    for co in range(cout):
        acc = xs[0] * w_ref[co, 0]
        for ci in range(1, cin):
            acc = acc + xs[ci] * w_ref[co, ci]
        acc = acc + b_ref[co]
        o_ref[:, co, :, :] = jax.nn.sigmoid(acc).astype(o_ref.dtype)


def _pick_rows(R, want):
    """Rows-per-block: full extent if small, else a multiple of 8 near `want`
    that divides R (ragged tail falls back to Pallas edge-block masking)."""
    if R <= want:
        return R
    want8 = max(8, (want // 8) * 8)
    for cand in range(want8, 7, -8):
        if R % cand == 0:
            return cand
    return want8  # non-divisor: last block is masked by Pallas


def out_conv(x_nchw, weight, bias, *,
             target_step_bytes=2 << 20,   # ~2 MiB HBM traffic per grid step
             vmem_cap_bytes=8 << 20):     # double-buffered in+out cap (v5e-safe)
    """1x1 Conv2d + Sigmoid, matching nn.Conv2d(in, out, kernel_size=1)+Sigmoid.

    x_nchw: [B, Cin, H, W]
    weight: [Cout, Cin] (or [Cout, Cin, 1, 1])
    bias:   [Cout]
    returns [B, Cout, H, W]  (same dtype as x)
    """
    B, Cin, H, W = x_nchw.shape
    Cout = weight.shape[0]
    S = H * W
    L = LANES

    w2 = jnp.asarray(weight, jnp.float32).reshape(Cout, Cin)
    b1 = jnp.asarray(bias, jnp.float32).reshape(Cout)

    # Free reshape (NCHW is contiguous over H, W); pad only up to the next
    # multiple of 128 lanes.
    x3 = x_nchw.reshape(B, Cin, S)
    Sp = -(-S // L) * L
    if Sp != S:
        x3 = jnp.pad(x3, ((0, 0), (0, 0), (0, Sp - S)))
    R = Sp // L
    x4 = x3.reshape(B, Cin, R, L)          # dense (sublane, lane) per channel

    itemsize = jnp.dtype(x_nchw.dtype).itemsize
    bytes_per_row = (Cin + Cout) * L * itemsize        # HBM bytes per (batch, row)
    want_rows = max(8, target_step_bytes // bytes_per_row)
    want_rows = min(want_rows, max(8, vmem_cap_bytes // (2 * bytes_per_row)))

    # Pack whole batch elements into a block when one batch's rows are small.
    nb = 1
    if R < want_rows and B > 1:
        max_nb = max(1, want_rows // R)
        for d in range(min(B, max_nb), 0, -1):
            if B % d == 0:
                nb = d
                break

    tr = _pick_rows(R, max(1, want_rows // nb))
    n_b = B // nb
    n_r = pl.cdiv(R, tr)

    # Keep >= 2 balanced grid steps when each half still moves >~1 MiB, so
    # both v7x TensorCores get work without drowning in step overhead.
    if n_b * n_r < 2:
        step_bytes = nb * tr * bytes_per_row
        if nb % 2 == 0 and step_bytes >= (1 << 20):
            nb //= 2
            n_b = B // nb
        elif tr % 16 == 0 and step_bytes >= (1 << 20):
            tr //= 2
            n_r = pl.cdiv(R, tr)

    grid = (n_b, n_r)

    cost = pl.CostEstimate(
        flops=2 * B * Sp * Cin * Cout,
        transcendentals=B * Sp * Cout,
        bytes_accessed=(B * Cin * Sp + B * Cout * Sp) * itemsize
                       + (Cout * Cin + Cout) * 4,
    )

    out4 = pl.pallas_call(
        outconv_kernel,
        out_shape=jax.ShapeDtypeStruct((B, Cout, R, L), x_nchw.dtype),
        grid_spec=pltpu.PrefetchScalarGridSpec(
            num_scalar_prefetch=0,
            grid=grid,
            in_specs=[
                # (nb, Cin, tr, 128): batch/rows tiled, channels full extent.
                pl.BlockSpec((nb, Cin, tr, L), lambda b, r: (b, 0, r, 0)),
                # Tiny weight / bias live in SMEM as scalars.
                pl.BlockSpec(memory_space=pltpu.MemorySpace.SMEM),
                pl.BlockSpec(memory_space=pltpu.MemorySpace.SMEM),
            ],
            out_specs=pl.BlockSpec((nb, Cout, tr, L), lambda b, r: (b, 0, r, 0)),
        ),
        compiler_params=pltpu.CompilerParams(
            dimension_semantics=("parallel", "parallel"),
        ),
        cost_estimate=cost,
    )(x4, w2, b1)

    out3 = out4.reshape(B, Cout, Sp)
    if Sp != S:
        out3 = out3[:, :, :S]
    return out3.reshape(B, Cout, H, W)


if __name__ == "__main__":
    in_channels, out_channels = 4, 2
    B, H, W = 2, 16, 16

    key = jax.random.PRNGKey(0)
    kx, kw, kb = jax.random.split(key, 3)

    # Deterministic parameter init (mimics PyTorch's uniform fan-in init).
    fan_in = in_channels  # kernel_size = 1
    bound = 1.0 / (fan_in ** 0.5)
    weight = jax.random.uniform(kw, (out_channels, in_channels),
                                minval=-bound, maxval=bound,
                                dtype=jnp.float32)
    bias = jax.random.uniform(kb, (out_channels,),
                              minval=-bound, maxval=bound,
                              dtype=jnp.float32)

    x = jax.random.normal(kx, (B, in_channels, H, W), dtype=jnp.float32)

    out = out_conv(x, weight, bias)
    out = jax.block_until_ready(out)

    # Sanity check against plain-JAX reference of the 1x1 conv + sigmoid.
    ref = jax.nn.sigmoid(
        jnp.einsum("bchw,oc->bohw", x, weight) + bias[None, :, None, None]
    )
    assert out.shape == (B, out_channels, H, W)
    assert jnp.allclose(out, ref, atol=1e-5, rtol=1e-5)

    print("KERNEL_OK")
</pallas_src>

<mosaic_0001>
module attributes {stable_mosaic.version = 11 : i64} {
  func.func @outconv_kernel(%arg0: i32, %arg1: i32, %arg2: memref<2x4x2x128xf32, #tpu.memory_space<vmem>>, %arg3: memref<2x4xf32, #tpu.memory_space<smem>>, %arg4: memref<2xf32, #tpu.memory_space<smem>>, %arg5: memref<2x2x2x128xf32, #tpu.memory_space<vmem>>) attributes {dimension_semantics = [#tpu.dimension_semantics<parallel>, #tpu.dimension_semantics<parallel>], iteration_bounds = array<i64: 1, 1>, scalar_prefetch = 0 : i64, scratch_operands = 0 : i64, tpu.core_type = #tpu.core_type<tc>, window_params = [{transform_indices = @transform_0, window_bounds = array<i64: 2, 4, 2, 128>}, {transform_indices = @transform_1, window_bounds = array<i64: 2, 4>}, {transform_indices = @transform_2, window_bounds = array<i64: 2>}, {transform_indices = @transform_3, window_bounds = array<i64: 2, 2, 2, 128>}]} {
    %c0 = arith.constant 0 : index
    %c0_0 = arith.constant 0 : index
    %c0_1 = arith.constant 0 : index
    %c0_2 = arith.constant 0 : index
    %0 = vector.load %arg2[%c0, %c0_0, %c0_1, %c0_2] : memref<2x4x2x128xf32, #tpu.memory_space<vmem>>, vector<2x1x2x128xf32>
    %1 = vector.shape_cast %0 : vector<2x1x2x128xf32> to vector<2x2x128xf32>
    %c0_3 = arith.constant 0 : index
    %c1 = arith.constant 1 : index
    %c0_4 = arith.constant 0 : index
    %c0_5 = arith.constant 0 : index
    %2 = vector.load %arg2[%c0_3, %c1, %c0_4, %c0_5] : memref<2x4x2x128xf32, #tpu.memory_space<vmem>>, vector<2x1x2x128xf32>
    %3 = vector.shape_cast %2 : vector<2x1x2x128xf32> to vector<2x2x128xf32>
    %c0_6 = arith.constant 0 : index
    %c2 = arith.constant 2 : index
    %c0_7 = arith.constant 0 : index
    %c0_8 = arith.constant 0 : index
    %4 = vector.load %arg2[%c0_6, %c2, %c0_7, %c0_8] : memref<2x4x2x128xf32, #tpu.memory_space<vmem>>, vector<2x1x2x128xf32>
    %5 = vector.shape_cast %4 : vector<2x1x2x128xf32> to vector<2x2x128xf32>
    %c0_9 = arith.constant 0 : index
    %c3 = arith.constant 3 : index
    %c0_10 = arith.constant 0 : index
    %c0_11 = arith.constant 0 : index
    %6 = vector.load %arg2[%c0_9, %c3, %c0_10, %c0_11] : memref<2x4x2x128xf32, #tpu.memory_space<vmem>>, vector<2x1x2x128xf32>
    %7 = vector.shape_cast %6 : vector<2x1x2x128xf32> to vector<2x2x128xf32>
    %c0_12 = arith.constant 0 : index
    %c0_13 = arith.constant 0 : index
    %8 = memref.load %arg3[%c0_12, %c0_13] : memref<2x4xf32, #tpu.memory_space<smem>>
    %9 = vector.broadcast %8 : f32 to vector<2x2x128xf32>
    %10 = arith.mulf %1, %9 : vector<2x2x128xf32>
    %c0_14 = arith.constant 0 : index
    %c1_15 = arith.constant 1 : index
    %11 = memref.load %arg3[%c0_14, %c1_15] : memref<2x4xf32, #tpu.memory_space<smem>>
    %12 = vector.broadcast %11 : f32 to vector<2x2x128xf32>
    %13 = arith.mulf %3, %12 : vector<2x2x128xf32>
    %14 = arith.addf %10, %13 : vector<2x2x128xf32>
    %c0_16 = arith.constant 0 : index
    %c2_17 = arith.constant 2 : index
    %15 = memref.load %arg3[%c0_16, %c2_17] : memref<2x4xf32, #tpu.memory_space<smem>>
    %16 = vector.broadcast %15 : f32 to vector<2x2x128xf32>
    %17 = arith.mulf %5, %16 : vector<2x2x128xf32>
    %18 = arith.addf %14, %17 : vector<2x2x128xf32>
    %c0_18 = arith.constant 0 : index
    %c3_19 = arith.constant 3 : index
    %19 = memref.load %arg3[%c0_18, %c3_19] : memref<2x4xf32, #tpu.memory_space<smem>>
    %20 = vector.broadcast %19 : f32 to vector<2x2x128xf32>
    %21 = arith.mulf %7, %20 : vector<2x2x128xf32>
    %22 = arith.addf %18, %21 : vector<2x2x128xf32>
    %c0_20 = arith.constant 0 : index
    %23 = memref.load %arg4[%c0_20] : memref<2xf32, #tpu.memory_space<smem>>
    %24 = vector.broadcast %23 : f32 to vector<2x2x128xf32>
    %25 = arith.addf %22, %24 : vector<2x2x128xf32>
    %26 = arith.negf %25 : vector<2x2x128xf32>
    %27 = math.exp %26 : vector<2x2x128xf32>
    %cst = arith.constant 1.000000e+00 : f32
    %28 = vector.broadcast %cst : f32 to vector<2x2x128xf32>
    %29 = arith.addf %28, %27 : vector<2x2x128xf32>
    %30 = arith.divf %28, %29 : vector<2x2x128xf32>
    %c0_21 = arith.constant 0 : index
    %c0_22 = arith.constant 0 : index
    %c0_23 = arith.constant 0 : index
    %c0_24 = arith.constant 0 : index
    %31 = vector.load %arg5[%c0_21, %c0_22, %c0_23, %c0_24] : memref<2x2x2x128xf32, #tpu.memory_space<vmem>>, vector<2x1x2x128xf32>
    %32 = vector.shape_cast %31 : vector<2x1x2x128xf32> to vector<2x2x128xf32>
    %33 = vector.shape_cast %30 : vector<2x2x128xf32> to vector<2x1x2x128xf32>
    tpu.vector_store %arg5[%c0_21, %c0_22, %c0_23, %c0_24], %33 {strides = array<i32>} : memref<2x2x2x128xf32, #tpu.memory_space<vmem>>, vector<2x1x2x128xf32>,
    %c1_25 = arith.constant 1 : index
    %c0_26 = arith.constant 0 : index
    %34 = memref.load %arg3[%c1_25, %c0_26] : memref<2x4xf32, #tpu.memory_space<smem>>
    %35 = vector.broadcast %34 : f32 to vector<2x2x128xf32>
    %36 = arith.mulf %1, %35 : vector<2x2x128xf32>
    %c1_27 = arith.constant 1 : index
    %c1_28 = arith.constant 1 : index
    %37 = memref.load %arg3[%c1_27, %c1_28] : memref<2x4xf32, #tpu.memory_space<smem>>
    %38 = vector.broadcast %37 : f32 to vector<2x2x128xf32>
    %39 = arith.mulf %3, %38 : vector<2x2x128xf32>
    %40 = arith.addf %36, %39 : vector<2x2x128xf32>
    %c1_29 = arith.constant 1 : index
    %c2_30 = arith.constant 2 : index
    %41 = memref.load %arg3[%c1_29, %c2_30] : memref<2x4xf32, #tpu.memory_space<smem>>
    %42 = vector.broadcast %41 : f32 to vector<2x2x128xf32>
    %43 = arith.mulf %5, %42 : vector<2x2x128xf32>
    %44 = arith.addf %40, %43 : vector<2x2x128xf32>
    %c1_31 = arith.constant 1 : index
    %c3_32 = arith.constant 3 : index
    %45 = memref.load %arg3[%c1_31, %c3_32] : memref<2x4xf32, #tpu.memory_space<smem>>
    %46 = vector.broadcast %45 : f32 to vector<2x2x128xf32>
    %47 = arith.mulf %7, %46 : vector<2x2x128xf32>
    %48 = arith.addf %44, %47 : vector<2x2x128xf32>
    %c1_33 = arith.constant 1 : index
    %49 = memref.load %arg4[%c1_33] : memref<2xf32, #tpu.memory_space<smem>>
    %50 = vector.broadcast %49 : f32 to vector<2x2x128xf32>
    %51 = arith.addf %48, %50 : vector<2x2x128xf32>
    %52 = arith.negf %51 : vector<2x2x128xf32>
    %53 = math.exp %52 : vector<2x2x128xf32>
    %cst_34 = arith.constant 1.000000e+00 : f32
    %54 = vector.broadcast %cst_34 : f32 to vector<2x2x128xf32>
    %55 = arith.addf %54, %53 : vector<2x2x128xf32>
    %56 = arith.divf %54, %55 : vector<2x2x128xf32>
    %c0_35 = arith.constant 0 : index
    %c1_36 = arith.constant 1 : index
    %c0_37 = arith.constant 0 : index
    %c0_38 = arith.constant 0 : index
    %57 = vector.load %arg5[%c0_35, %c1_36, %c0_37, %c0_38] : memref<2x2x2x128xf32, #tpu.memory_space<vmem>>, vector<2x1x2x128xf32>
    %58 = vector.shape_cast %57 : vector<2x1x2x128xf32> to vector<2x2x128xf32>
    %59 = vector.shape_cast %56 : vector<2x2x128xf32> to vector<2x1x2x128xf32>
    tpu.vector_store %arg5[%c0_35, %c1_36, %c0_37, %c0_38], %59 {strides = array<i32>} : memref<2x2x2x128xf32, #tpu.memory_space<vmem>>, vector<2x1x2x128xf32>,
    return
  }
  func.func @transform_0(%arg0: i32, %arg1: i32) -> (i32, i32, i32, i32) {
    %c0_i32 = arith.constant 0 : i32
    %c0_i32_0 = arith.constant 0 : i32
    %c0_i32_1 = arith.constant 0 : i32
    return %arg0, %c0_i32, %arg1, %c0_i32_0 : i32, i32, i32, i32
  }
  func.func @transform_1(%arg0: i32, %arg1: i32) -> (i32, i32) {
    %c0_i32 = arith.constant 0 : i32
    %c0_i32_0 = arith.constant 0 : i32
    %c0_i32_1 = arith.constant 0 : i32
    return %c0_i32, %c0_i32_0 : i32, i32
  }
  func.func @transform_2(%arg0: i32, %arg1: i32) -> i32 {
    %c0_i32 = arith.constant 0 : i32
    %c0_i32_0 = arith.constant 0 : i32
    return %c0_i32 : i32
  }
  func.func @transform_3(%arg0: i32, %arg1: i32) -> (i32, i32, i32, i32) {
    %c0_i32 = arith.constant 0 : i32
    %c0_i32_0 = arith.constant 0 : i32
    %c0_i32_1 = arith.constant 0 : i32
    return %arg0, %c0_i32, %arg1, %c0_i32_0 : i32, i32, i32, i32
  }
}

</mosaic_0001>

<llo_original>
// kernel: tpu_custom_call.1
$region0: #{tpu_custom_call.1}
  #allocation0 [shape = 'u32[]', space=smem, size = 0x4, offset = 0x4, fixed_abs, tag = 'smem constant byte address 0x4 - core index']
  #allocation1 [shape = 'u32[144,128]{1,0:T(1,128)}', space=vmem, size = 0x12000, scoped, tag = 'internal scratch']
  %s0 = inlined_call_operand.hbm [shape: f32[2,4,2,128], index: 0, kind: input, shape index: {}]
  %s1 = inlined_call_operand.vmem [shape: f32[2,4], index: 1, kind: input, shape index: {}]
  %s2 = inlined_call_operand.vmem [shape: f32[2], index: 2, kind: input, shape index: {}]
  %s3 = inlined_call_operand.hbm [shape: f32[2,2,2,128], index: 3, kind: output, shape index: {}]
  %s4 = sld [smem:[#allocation0]]
  $region34: #{tpu_custom_call.1} parent=0
    _
  %s6 = ssub.s32 1, %s4
  %s7 = scalar_select 0, %s6, %s4
  $region1: #{tpu_custom_call.1} parent=0
    #allocation2 [shape = 'u8[8192]{0}', space=vmem, size = 0x2000, scoped, tag = 'input window, operand 0, single buffered']
    #allocation3 [shape = 's32[1]{0}', space=sflag, size = 0x4, scoped, tag = 'scoped memory for tpu_custom_call.1']
    #allocation4 [shape = 's32[1]{0}', space=sflag, size = 0x4, scoped, tag = 'scoped memory for tpu_custom_call.1']
    #allocation5 [shape = 's32[1]{0}', space=sflag, size = 0x4, scoped, tag = 'scoped memory for tpu_custom_call.1']
    #allocation6 [shape = 'u8[1024]{0}', space=smem, size = 0x400, scoped, tag = 'input window, operand 1, single buffered']
    #allocation7 [shape = 'u8[512]{0}', space=smem, size = 0x200, scoped, tag = 'input window, operand 2, single buffered']
    #allocation8 [shape = 's32[1]{0}', space=sflag, size = 0x4, scoped, tag = 'scoped memory for tpu_custom_call.1']
    #allocation9 [shape = 'u8[4096]{0}', space=vmem, size = 0x1000, scoped, tag = 'output window, operand 0, single buffered']
    %8 = vsyncpa [#allocation3], 0
    %9 = vsyncpa [#allocation5], 0
    %10 = vsyncpa [#allocation8], 0
    %11 = vsyncpa [#allocation4], 0
    // Predicated region
    $region2: #{tpu_custom_call.1} parent=1 // pred_check
      _
    $region3: #{tpu_custom_call.1} parent=1 // pred_check_branch
      %13 = sbr.rel (0) target = $region5
    $region4: #{tpu_custom_call.1} parent=1 // pred_region
      %s15 = ssub.s32 256, 256
      %16 = vsyncadd [#allocation3], %s15
      %s17 = sshll.u32 [#allocation2], 4
      %s18 = int_to_ptr.vmem [resolvable:$true] %s17
      %23 = dma.hbm_to_vmem [thread:$0]  %s0, 256, %s18, [#allocation3], 32, 32, 2
    $region5: #{tpu_custom_call.1} parent=1 // pred_fallthru
      _
    // Predicated region
    $region6: #{tpu_custom_call.1} parent=1 // pred_check
      _
    $region7: #{tpu_custom_call.1} parent=1 // pred_check_branch
      %25 = sbr.rel (0) target = $region9
    $region8: #{tpu_custom_call.1} parent=1 // pred_region
      %s27 = ssub.s32 32, 32
      %28 = vsyncadd [#allocation5], %s27
      %s30 = sshll.u32 %s1, 4
      %s31 = int_to_ptr.vmem [resolvable:$true] %s30
      %33 = dma.vmem_to_smem %s31, 32, [#allocation6], [#allocation5]
    $region9: #{tpu_custom_call.1} parent=1 // pred_fallthru
      _
    // Predicated region
    $region10: #{tpu_custom_call.1} parent=1 // pred_check
      _
    $region11: #{tpu_custom_call.1} parent=1 // pred_check_branch
      %35 = sbr.rel (0) target = $region13
    $region12: #{tpu_custom_call.1} parent=1 // pred_region
      %s37 = ssub.s32 16, 16
      %38 = vsyncadd [#allocation8], %s37
      %s40 = sshll.u32 %s2, 4
      %s41 = int_to_ptr.vmem [resolvable:$true] %s40
      %43 = dma.vmem_to_smem %s41, 16, [#allocation7], [#allocation8]
    $region13: #{tpu_custom_call.1} parent=1 // pred_fallthru
      _
    // Predicated region
    $region14: #{tpu_custom_call.1} parent=1 // pred_check
      _
    $region15: #{tpu_custom_call.1} parent=1 // pred_check_branch
      %45 = sbr.rel (0) target = $region17
    $region16: #{tpu_custom_call.1} parent=1 // pred_region
      %46 = dma.done [#allocation3], 256
    $region17: #{tpu_custom_call.1} parent=1 // pred_fallthru
      _
    // Predicated region
    $region18: #{tpu_custom_call.1} parent=1 // pred_check
      _
    $region19: #{tpu_custom_call.1} parent=1 // pred_check_branch
      %48 = sbr.rel (0) target = $region21
    $region20: #{tpu_custom_call.1} parent=1 // pred_region
      %49 = dma.done [#allocation5], 32
    $region21: #{tpu_custom_call.1} parent=1 // pred_fallthru
      _
    // Predicated region
    $region22: #{tpu_custom_call.1} parent=1 // pred_check
      _
    $region23: #{tpu_custom_call.1} parent=1 // pred_check_branch
      %51 = sbr.rel (0) target = $region25
    $region24: #{tpu_custom_call.1} parent=1 // pred_region
      %52 = dma.done [#allocation8], 16
    $region25: #{tpu_custom_call.1} parent=1 // pred_fallthru
      _
    %53 = sfence
    %v54 = vld [vmem:[#allocation2] sm:$0x3]
    %v55 = vld [vmem:[#allocation2 + $0x8] sm:$0x3]
    %s56 = scalar_lea.vmem [#allocation2], 2
    %v57 = vld [vmem:[%s56] sm:$0x3]
    %v58 = vld [vmem:[%s56 + $0x8] sm:$0x3]
    %s59 = scalar_lea.vmem [#allocation2], 4
    %v60 = vld [vmem:[%s59] sm:$0x3]
    %v61 = vld [vmem:[%s59 + $0x8] sm:$0x3]
    %s62 = scalar_lea.vmem [#allocation2], 6
    %v63 = vld [vmem:[%s62] sm:$0x3]
    %v64 = vld [vmem:[%s62 + $0x8] sm:$0x3]
    %s65 = sld [smem:[#allocation6]]
    %v66 = vstv %s65
    %v67 = vmul.f32 %v54, %v66
    %v68 = vmul.f32 %v55, %v66
    %s69 = sld [smem:[#allocation6 + $0x1]]
    %v70 = vstv %s69
    %v71 = vmul.f32 %v57, %v70
    %v72 = vmul.f32 %v58, %v70
    %v73 = vadd.f32 %v67, %v71
    %v74 = vadd.f32 %v68, %v72
    %s75 = sld [smem:[#allocation6 + $0x2]]
    %v76 = vstv %s75
    %v77 = vmul.f32 %v60, %v76
    %v78 = vmul.f32 %v61, %v76
    %v79 = vadd.f32 %v73, %v77
    %v80 = vadd.f32 %v74, %v78
    %s81 = sld [smem:[#allocation6 + $0x3]]
    %v82 = vstv %s81
    %v83 = vmul.f32 %v63, %v82
    %v84 = vmul.f32 %v64, %v82
    %v85 = vadd.f32 %v79, %v83
    %v86 = vadd.f32 %v80, %v84
    %s87 = sld [smem:[#allocation7]]
    %v88 = vstv %s87
    %v89 = vadd.f32 %v85, %v88
    %v90 = vadd.f32 %v86, %v88
    %v91 = vxor.u32 %v89, 2147483648
    %v92 = vxor.u32 %v90, 2147483648
    %v93 = vmul.f32 %v91, 1.442695
    %v94 = vpow.pop %v93
    %v95 = vmul.f32 %v92, 1.442695
    %v96 = vpow.pop %v95
    %v97 = vadd.f32 %v94, 1.0
    %v98 = vadd.f32 %v96, 1.0
    %v99 = vrcp.pop %v97
    %v100 = vmul.f32 1.0, %v99
    %v101 = vrcp.pop %v98
    %v102 = vmul.f32 1.0, %v101
    %103 = vst [vmem:[#allocation9] sm:$0x3] %v100
    %104 = vst [vmem:[#allocation9 + $0x4] sm:$0x3] %v102
    %s105 = sld [smem:[#allocation6 + $0x80]]
    %v106 = vstv %s105
    %v107 = vmul.f32 %v54, %v106
    %v108 = vmul.f32 %v55, %v106
    %s109 = sld [smem:[#allocation6 + $0x81]]
    %v110 = vstv %s109
    %v111 = vmul.f32 %v57, %v110
    %v112 = vmul.f32 %v58, %v110
    %v113 = vadd.f32 %v107, %v111
    %v114 = vadd.f32 %v108, %v112
    %s115 = sld [smem:[#allocation6 + $0x82]]
    %v116 = vstv %s115
    %v117 = vmul.f32 %v60, %v116
    %v118 = vmul.f32 %v61, %v116
    %v119 = vadd.f32 %v113, %v117
    %v120 = vadd.f32 %v114, %v118
    %s121 = sld [smem:[#allocation6 + $0x83]]
    %v122 = vstv %s121
    %v123 = vmul.f32 %v63, %v122
    %v124 = vmul.f32 %v64, %v122
    %v125 = vadd.f32 %v119, %v123
    %v126 = vadd.f32 %v120, %v124
    %s127 = sld [smem:[#allocation7 + $0x1]]
    %v128 = vstv %s127
    %v129 = vadd.f32 %v125, %v128
    %v130 = vadd.f32 %v126, %v128
    %v131 = vxor.u32 %v129, 2147483648
    %v132 = vxor.u32 %v130, 2147483648
    %v133 = vmul.f32 %v131, 1.442695
    %v134 = vpow.pop %v133
    %v135 = vmul.f32 %v132, 1.442695
    %v136 = vpow.pop %v135
    %v137 = vadd.f32 %v134, 1.0
    %v138 = vadd.f32 %v136, 1.0
    %v139 = vrcp.pop %v137
    %v140 = vmul.f32 1.0, %v139
    %v141 = vrcp.pop %v138
    %v142 = vmul.f32 1.0, %v141
    %s143 = scalar_lea.vmem [#allocation9], 2
    %144 = vst [vmem:[%s143] sm:$0x3] %v140
    %145 = vst [vmem:[%s143 + $0x4] sm:$0x3] %v142
    // Predicated region
    $region26: #{tpu_custom_call.1} parent=1 // pred_check
      _
    $region27: #{tpu_custom_call.1} parent=1 // pred_check_branch
      %147 = sbr.rel (0) target = $region29
    $region28: #{tpu_custom_call.1} parent=1 // pred_region
      %s149 = ssub.s32 128, 128
      %150 = vsyncadd [#allocation4], %s149
      %s151 = sshll.u32 [#allocation9], 4
      %s152 = int_to_ptr.vmem [resolvable:$true] %s151
      %157 = dma.vmem_to_hbm [thread:$0]  %s152, 128, %s3, [#allocation4], 32, 32, 2
    $region29: #{tpu_custom_call.1} parent=1 // pred_fallthru
      _
    // Predicated region
    $region30: #{tpu_custom_call.1} parent=1 // pred_check
      _
    $region31: #{tpu_custom_call.1} parent=1 // pred_check_branch
      %159 = sbr.rel (0) target = $region33
    $region32: #{tpu_custom_call.1} parent=1 // pred_region
      %160 = dma.done [#allocation4], 128
    $region33: #{tpu_custom_call.1} parent=1 // pred_fallthru
      _
    %161 = vsyncpa [#allocation3], 1
    %162 = vsyncpa [#allocation4], 1
    %163 = vsyncpa [#allocation5], 1
    %164 = vsyncpa [#allocation8], 1

</llo_original>
